<compile_context>
chip_gen: v6e
topology: v6e:2x2x1
jax: 0.10.0
libtpu: 0.0.40
codegen_flags: <defaults>
</compile_context>

<pallas_src>
import jax
import jax.numpy as jnp
import numpy as np
from jax.experimental import pallas as pl
from jax.experimental.pallas import tpu as pltpu


def _ceil_to(x, m):
    return ((x + m - 1) // m) * m


# --------------------------------------------------------------------------
# Kernel 1: rows @ W + b  (used to hoist the input-to-hidden GRU projection)
# --------------------------------------------------------------------------
def matmul_bias_kernel(x_ref, w_ref, b_ref, o_ref):
    o_ref[...] = (jnp.dot(x_ref[...], w_ref[...],
                          preferred_element_type=jnp.float32)
                  + b_ref[...]).astype(o_ref.dtype)


def run_matmul_bias(x_rk, w_kn, b_1n, *, row_tile=8):
    # row_tile: use 256-512 at real sizes; 8 for the toy config.
    R, K = x_rk.shape
    N = w_kn.shape[-1]
    Rp = _ceil_to(R, row_tile)
    if Rp != R:
        x_rk = jnp.pad(x_rk, ((0, Rp - R), (0, 0)))
    out = pl.pallas_call(
        matmul_bias_kernel,
        out_shape=jax.ShapeDtypeStruct((Rp, N), jnp.float32),
        grid_spec=pltpu.PrefetchScalarGridSpec(
            num_scalar_prefetch=0,
            grid=(Rp // row_tile,),
            in_specs=[
                pl.BlockSpec((row_tile, K), lambda r: (r, 0)),
                pl.BlockSpec((K, N), lambda r: (0, 0)),   # weight resident
                pl.BlockSpec((1, N), lambda r: (0, 0)),
            ],
            out_specs=pl.BlockSpec((row_tile, N), lambda r: (r, 0)),
        ),
        compiler_params=pltpu.CompilerParams(
            dimension_semantics=("parallel",)),
    )(x_rk, w_kn, b_1n)
    return out[:R]


# --------------------------------------------------------------------------
# Kernel 2: masked GRU recurrence, TT timesteps per grid iteration
# --------------------------------------------------------------------------
def gru_chunk_kernel(gi_ref, len_ref, h0_ref, whh_ref, bhh_ref,
                     out_ref, hfin_ref, h_scratch):
    c = pl.program_id(0)
    TT = gi_ref.shape[1]
    H = h0_ref.shape[-1]

    @pl.when(c == 0)
    def _():
        h_scratch[...] = h0_ref[...].astype(jnp.float32)

    whh = whh_ref[...]            # [H, 3H]  (resident, loaded once per chunk)
    bhh = bhh_ref[...]            # [1, 3H]
    lens = len_ref[...]           # [B, 1] int32
    t0 = c * TT

    h = h_scratch[...]            # [B, H]
    # Inner chunk loop: statically unrolled (TT is small and static); the
    # recurrence is inherently serial so only the h @ W_hh matmul remains
    # on the critical path (gi was precomputed outside the recurrence).
    for i in range(TT):
        gi = gi_ref[:, i, :]                                       # [B, 3H]
        gh = jnp.dot(h, whh, preferred_element_type=jnp.float32) + bhh
        # PyTorch gate order r | z | n along the fused 3H axis.
        r = jax.nn.sigmoid(gi[:, :H] + gh[:, :H])
        z = jax.nn.sigmoid(gi[:, H:2 * H] + gh[:, H:2 * H])
        n = jnp.tanh(gi[:, 2 * H:] + r * gh[:, 2 * H:])
        h_new = (1.0 - z) * n + z * h
        mask = (t0 + i) < lens                                     # [B, 1]
        h = jnp.where(mask, h_new, h)                # frozen past seq end
        out_ref[:, i, :] = jnp.where(mask, h_new, 0.0).astype(out_ref.dtype)
    h_scratch[...] = h

    @pl.when(c == pl.num_programs(0) - 1)
    def _():
        hfin_ref[...] = h.astype(hfin_ref.dtype)


def run_gru(gi_btg, len_b1, h0_bh, whh, bhh, *, time_chunk=8):
    B, T_pad, G = gi_btg.shape
    H = h0_bh.shape[-1]
    TT = time_chunk
    assert T_pad % TT == 0
    out, hfin = pl.pallas_call(
        gru_chunk_kernel,
        out_shape=(jax.ShapeDtypeStruct((B, T_pad, H), jnp.float32),
                   jax.ShapeDtypeStruct((B, H), jnp.float32)),
        grid_spec=pltpu.PrefetchScalarGridSpec(
            num_scalar_prefetch=0,
            grid=(T_pad // TT,),
            in_specs=[
                pl.BlockSpec((B, TT, G), lambda c: (0, c, 0)),  # precomputed gi
                pl.BlockSpec((B, 1), lambda c: (0, 0)),         # lengths
                pl.BlockSpec((B, H), lambda c: (0, 0)),         # h0
                pl.BlockSpec((H, G), lambda c: (0, 0)),         # W_hh (fused)
                pl.BlockSpec((1, G), lambda c: (0, 0)),         # b_hh (fused)
            ],
            out_specs=[
                pl.BlockSpec((B, TT, H), lambda c: (0, c, 0)),  # [B, T, H] direct
                pl.BlockSpec((B, H), lambda c: (0, 0)),         # final hidden
            ],
            scratch_shapes=[pltpu.VMEM((B, H), jnp.float32)],
        ),
        compiler_params=pltpu.CompilerParams(
            dimension_semantics=("arbitrary",)),
    )(gi_btg, len_b1, h0_bh, whh, bhh)
    return out, hfin


# --------------------------------------------------------------------------
# Kernel 3: output projection + log_softmax over (lane-padded) vocab
# --------------------------------------------------------------------------
def proj_logsoftmax_kernel(x_ref, w_ref, b_ref, o_ref):
    logits = jnp.dot(x_ref[...], w_ref[...],
                     preferred_element_type=jnp.float32) + b_ref[...]
    mx = jnp.max(logits, axis=-1, keepdims=True)
    s = logits - mx
    lse = jnp.log(jnp.sum(jnp.exp(s), axis=-1, keepdims=True))
    o_ref[...] = (s - lse).astype(o_ref.dtype)


def run_proj_logsoftmax(x_rh, w_hv, b_1v, *, row_tile=8):
    # row_tile: 256-512 at real sizes; keep W resident (constant index_map).
    # TODO(synk): for real H*V that exceeds VMEM (esp. v7x 64 MiB), tile V with
    #             an online-logsumexp accumulator and/or bf16 weights.
    R, H = x_rh.shape
    Vp = w_hv.shape[-1]
    Rp = _ceil_to(R, row_tile)
    if Rp != R:
        x_rh = jnp.pad(x_rh, ((0, Rp - R), (0, 0)))
    out = pl.pallas_call(
        proj_logsoftmax_kernel,
        out_shape=jax.ShapeDtypeStruct((Rp, Vp), jnp.float32),
        grid_spec=pltpu.PrefetchScalarGridSpec(
            num_scalar_prefetch=0,
            grid=(Rp // row_tile,),
            in_specs=[
                pl.BlockSpec((row_tile, H), lambda r: (r, 0)),
                pl.BlockSpec((H, Vp), lambda r: (0, 0)),        # weight resident
                pl.BlockSpec((1, Vp), lambda r: (0, 0)),
            ],
            out_specs=pl.BlockSpec((row_tile, Vp), lambda r: (r, 0)),
        ),
        compiler_params=pltpu.CompilerParams(
            dimension_semantics=("parallel",)),
    )(x_rh, w_hv, b_1v)
    return out[:R]


# --------------------------------------------------------------------------
# Full PlainDecoder forward (glue in plain JAX, hot paths in Pallas)
# --------------------------------------------------------------------------
def plain_decoder_forward(params, y, y_lengths, hid, *, time_chunk=8, row_tile=8):
    """y: [B, T] int32 token ids, y_lengths: [B] int32, hid: [1, B, H]."""
    B, T = y.shape
    H = hid.shape[-1]
    V = params["w_out"].shape[-1]

    # Embedding lookup (gather glue) + eval-mode dropout (identity).
    y_embed = params["embed"][y]                     # [B, T, E]
    E = y_embed.shape[-1]

    # 1) Hoisted input-to-hidden projection: one large MXU-friendly matmul.
    gi_flat = run_matmul_bias(y_embed.reshape(B * T, E),
                              params["wih"], params["bih"], row_tile=row_tile)
    gi = gi_flat.reshape(B, T, 3 * H)                # batch-major, free reshape

    # 2) Masked GRU recurrence (time padded to a chunk multiple; padded steps
    #    are masked out since t >= length there).
    T_pad = _ceil_to(T, time_chunk)
    if T_pad != T:
        gi = jnp.pad(gi, ((0, 0), (0, T_pad - T), (0, 0)))
    lens = y_lengths.reshape(B, 1).astype(jnp.int32)
    out_bth, h_final = run_gru(gi, lens, hid[0],
                               params["whh"], params["bhh"],
                               time_chunk=time_chunk)
    out_bth = out_bth[:, :T, :]                      # [B, T, H] (no transpose)

    # 3) Projection + log_softmax. Pad vocab to a lane multiple (128) for
    #    dense stores; padded columns get -1e30 bias -> exp underflows to 0,
    #    so the log_softmax over the real columns is unchanged.
    V_pad = _ceil_to(V, 128)
    w_out_p = jnp.pad(params["w_out"], ((0, 0), (0, V_pad - V)))
    b_out_p = jnp.pad(params["b_out"], ((0, 0), (0, V_pad - V)),
                      constant_values=-1e30)
    logp = run_proj_logsoftmax(out_bth.reshape(B * T, H), w_out_p, b_out_p,
                               row_tile=row_tile)
    output = logp[:, :V].reshape(B, T, V)            # [B, T, V]
    return output, h_final[None]                     # hid: [1, B, H]


# --------------------------------------------------------------------------
# Pure-JAX reference (mirrors PyTorch semantics) for a correctness check
# --------------------------------------------------------------------------
def reference_forward(params, y, y_lengths, hid):
    B, T = y.shape
    H = hid.shape[-1]
    emb = params["embed"][y]                           # [B, T, E]
    gi_all = emb @ params["wih"] + params["bih"]       # [B, T, 3H]
    gi_tb = jnp.transpose(gi_all, (1, 0, 2))           # [T, B, 3H]
    t_idx = jnp.arange(T, dtype=jnp.int32)[:, None]
    mask = (t_idx < y_lengths[None, :])[:, :, None]    # [T, B, 1] bool

    def step(h, inp):
        gi, m = inp
        gh = h @ params["whh"] + params["bhh"]
        r = jax.nn.sigmoid(gi[:, :H] + gh[:, :H])
        z = jax.nn.sigmoid(gi[:, H:2 * H] + gh[:, H:2 * H])
        n = jnp.tanh(gi[:, 2 * H:] + r * gh[:, 2 * H:])
        h_new = (1.0 - z) * n + z * h
        h_next = jnp.where(m, h_new, h)
        return h_next, jnp.where(m, h_new, 0.0)

    h_fin, out_tbh = jax.lax.scan(step, hid[0], (gi_tb, mask))
    out_bth = jnp.transpose(out_tbh, (1, 0, 2))
    logits = out_bth @ params["w_out"] + params["b_out"][0]
    return jax.nn.log_softmax(logits, axis=-1), h_fin[None]


def init_params(key, vocab_size, embed_size, hidden_size):
    ks = jax.random.split(key, 7)
    bound = 1.0 / np.sqrt(hidden_size)
    u = lambda k, shape: jax.random.uniform(k, shape, jnp.float32, -bound, bound)
    return {
        "embed": jax.random.normal(ks[0], (vocab_size, embed_size), jnp.float32),
        # Fused GRU weights, PyTorch gate order r|z|n concatenated on the last
        # axis, pre-transposed so kernels compute x @ W / h @ W.
        "wih": u(ks[1], (embed_size, 3 * hidden_size)),
        "whh": u(ks[2], (hidden_size, 3 * hidden_size)),
        "bih": u(ks[3], (1, 3 * hidden_size)),
        "bhh": u(ks[4], (1, 3 * hidden_size)),
        "w_out": u(ks[5], (hidden_size, vocab_size)),
        "b_out": u(ks[6], (1, vocab_size)),
    }


if __name__ == "__main__":
    VOCAB, EMBED, HIDDEN = 50, 32, 32
    B, T = 2, 16

    key = jax.random.PRNGKey(0)
    kp, ky, kh = jax.random.split(key, 3)

    params = init_params(kp, VOCAB, EMBED, HIDDEN)
    y = jax.random.randint(ky, (B, T), 0, VOCAB, dtype=jnp.int32)
    y_lengths = jnp.array([T, 11], dtype=jnp.int32)   # max(lengths) == T
    hid = jax.random.normal(kh, (1, B, HIDDEN), jnp.float32)

    output, hid_out = plain_decoder_forward(params, y, y_lengths, hid,
                                            time_chunk=8, row_tile=8)
    output = jax.block_until_ready(output)
    hid_out = jax.block_until_ready(hid_out)

    ref_out, ref_hid = reference_forward(params, y, y_lengths, hid)
    np.testing.assert_allclose(np.asarray(output), np.asarray(ref_out),
                               rtol=2e-5, atol=2e-5)
    np.testing.assert_allclose(np.asarray(hid_out), np.asarray(ref_hid),
                               rtol=2e-5, atol=2e-5)

    assert output.shape == (B, T, VOCAB)
    assert hid_out.shape == (1, B, HIDDEN)
    print("KERNEL_OK")
</pallas_src>

<mosaic_0001>
module attributes {stable_mosaic.version = 11 : i64} {
  func.func @matmul_bias_kernel(%arg0: i32, %arg1: memref<8x32xf32, #tpu.memory_space<vmem>>, %arg2: memref<32x96xf32, #tpu.memory_space<vmem>>, %arg3: memref<1x96xf32, #tpu.memory_space<vmem>>, %arg4: memref<8x96xf32, #tpu.memory_space<vmem>>) attributes {dimension_semantics = [#tpu.dimension_semantics<parallel>], iteration_bounds = array<i64: 4>, scalar_prefetch = 0 : i64, scratch_operands = 0 : i64, tpu.core_type = #tpu.core_type<tc>, window_params = [{transform_indices = @transform_0, window_bounds = array<i64: 8, 32>}, {pipeline_mode = #tpu.pipeline_mode<synchronous>, transform_indices = @transform_1, window_bounds = array<i64: 32, 96>}, {pipeline_mode = #tpu.pipeline_mode<synchronous>, transform_indices = @transform_2, window_bounds = array<i64: 1, 96>}, {transform_indices = @transform_3, window_bounds = array<i64: 8, 96>}]} {
    %c0 = arith.constant 0 : index
    %c0_0 = arith.constant 0 : index
    %0 = vector.load %arg1[%c0, %c0_0] : memref<8x32xf32, #tpu.memory_space<vmem>>, vector<8x32xf32>
    %c0_1 = arith.constant 0 : index
    %c0_2 = arith.constant 0 : index
    %1 = vector.load %arg2[%c0_1, %c0_2] : memref<32x96xf32, #tpu.memory_space<vmem>>, vector<32x96xf32>
    %cst = arith.constant dense<0.000000e+00> : vector<8x96xf32>
    %2 = tpu.matmul %0, %1, %cst {dimension_numbers = #tpu.dot_dimension_numbers<[1], [0], [0], [1], [0, 0, 1, 1], [], []>} : vector<8x32xf32>, vector<32x96xf32>, vector<8x96xf32> -> vector<8x96xf32>
    %c0_3 = arith.constant 0 : index
    %c0_4 = arith.constant 0 : index
    %3 = vector.load %arg3[%c0_3, %c0_4] : memref<1x96xf32, #tpu.memory_space<vmem>>, vector<1x96xf32>
    %4 = vector.broadcast %3 : vector<1x96xf32> to vector<8x96xf32>
    %5 = arith.addf %2, %4 : vector<8x96xf32>
    %c0_5 = arith.constant 0 : index
    %c0_6 = arith.constant 0 : index
    %6 = vector.load %arg4[%c0_5, %c0_6] : memref<8x96xf32, #tpu.memory_space<vmem>>, vector<8x96xf32>
    tpu.vector_store %arg4[%c0_5, %c0_6], %5 {strides = array<i32>} : memref<8x96xf32, #tpu.memory_space<vmem>>, vector<8x96xf32>,
    return
  }
  func.func @transform_0(%arg0: i32) -> (i32, i32) {
    %c0_i32 = arith.constant 0 : i32
    %c0_i32_0 = arith.constant 0 : i32
    return %arg0, %c0_i32 : i32, i32
  }
  func.func @transform_1(%arg0: i32) -> (i32, i32) {
    %c0_i32 = arith.constant 0 : i32
    %c0_i32_0 = arith.constant 0 : i32
    %c0_i32_1 = arith.constant 0 : i32
    return %c0_i32, %c0_i32_0 : i32, i32
  }
  func.func @transform_2(%arg0: i32) -> (i32, i32) {
    %c0_i32 = arith.constant 0 : i32
    %c0_i32_0 = arith.constant 0 : i32
    %c0_i32_1 = arith.constant 0 : i32
    return %c0_i32, %c0_i32_0 : i32, i32
  }
  func.func @transform_3(%arg0: i32) -> (i32, i32) {
    %c0_i32 = arith.constant 0 : i32
    %c0_i32_0 = arith.constant 0 : i32
    return %arg0, %c0_i32 : i32, i32
  }
}

</mosaic_0001>

<llo_original>
// kernel: tpu_custom_call.1
$region0: #{tpu_custom_call.1}
  #allocation0 [shape = 'u32[]', space=smem, size = 0x4, offset = 0x4, fixed_abs, tag = 'smem constant byte address 0x4 - core index']
  #allocation1 [shape = 'u32[144,128]{1,0:T(1,128)}', space=vmem, size = 0x12000, scoped, tag = 'internal scratch']
  %s0 = inlined_call_operand.hbm [shape: f32[32,32], index: 0, kind: input, shape index: {}]
  %s1 = inlined_call_operand.hbm [shape: f32[32,96], index: 1, kind: input, shape index: {}]
  %s2 = inlined_call_operand.vmem [shape: f32[1,96], index: 2, kind: input, shape index: {}]
  %s3 = inlined_call_operand.hbm [shape: f32[32,96], index: 3, kind: output, shape index: {}]
  %s4 = sld [smem:[#allocation0]]
  $region53: #{tpu_custom_call.1} parent=0
    _
  %s6 = ssub.s32 1, %s4
  %s7 = scalar_select 0, %s6, %s4
  $region1: #{tpu_custom_call.1} parent=0
    #allocation2 [shape = 'u8[8192]{0}', space=vmem, size = 0x2000, scoped, tag = 'input window, operand 0']
    #allocation3 [shape = 's32[2]{0}', space=sflag, size = 0x8, scoped, tag = 'scoped memory for tpu_custom_call.1']
    #allocation4 [shape = 's32[2]{0}', space=sflag, size = 0x8, scoped, tag = 'scoped memory for tpu_custom_call.1']
    #allocation5 [shape = 'u8[16384]{0}', space=vmem, size = 0x4000, scoped, tag = 'input window, operand 1, single buffered']
    #allocation6 [shape = 's32[1]{0}', space=sflag, size = 0x4, scoped, tag = 'scoped memory for tpu_custom_call.1']
    #allocation7 [shape = 'u8[8192]{0}', space=vmem, size = 0x2000, scoped, tag = 'output window, operand 0']
    %8 = vsyncpa [#allocation3], 0
    %s9 = scalar_lea.sflag [#allocation3], 1
    %10 = vsyncpa %s9, 0
    %11 = vsyncpa [#allocation6], 0
    %12 = vsyncpa [#allocation4], 0
    %s13 = scalar_lea.sflag [#allocation4], 1
    %14 = vsyncpa %s13, 0
    loop: start=0, step=1, limit=6
    $region2: #{tpu_custom_call.1} parent=1 // loop_pre_header
      _
    $region3: #{tpu_custom_call.1} parent=1 // loop_header
      %s16 = sphi 0, %s20
      %p17 = scmp.ge.s32.totalorder %s16, 6
      %s26 = sphi 0, %s28
      %s29 = sphi 0, %s26
      %s30 = sphi 0, %s29
      %s46 = sphi 0, %s30
      %s50 = sphi 0, %s50
      %s52 = sphi 0, %s50
      %s53 = sphi 0, %s52
      %s67 = sphi 0, %s53
      %s71 = sphi 0, %s71
      %s73 = sphi 0, %s71
      %s74 = sphi 0, %s73
      %s88 = sphi 0, %s74
      %s94 = sphi 0, %s96
      %s97 = sphi 0, %s94
      %s98 = sphi 0, %s97
      %s114 = sphi 0, %s98
    $region4: #{tpu_custom_call.1} parent=1 // loop_header_branch
      %19 = sbr.rel (%p17) target = $region8
    $region5: #{tpu_custom_call.1} parent=1 // loop_body
      %s21 = ssub.s32 %s16, 1
      %s22 = ssub.s32 %s16, 2
      %s23 = sadd.s32 %s16, 1
      %s24 = ssub.s32 %s16, %s23
      %p25 = scmp.eq.s32.totalorder %s24, 0
      %s27 = sadd.s32 %s26, 1
      %s28 = scalar_select %p25, %s26, %s27
      %p31 = pneg %p25
      %p32 = scmp.eq.s32.totalorder %s16, 3
      %p33 = por %p31, %p32
      %p34 = scmp.ne.s32.totalorder %s26, %s29
      %p35 = scmp.eq.s32.totalorder %s16, 0
      %p36 = por %p34, %p35
      %p37 = scmp.ne.s32.totalorder %s26, %s29
      %p38 = scmp.eq.s32.totalorder %s21, 3
      %p39 = por %p37, %p38
      %p40 = scmp.ne.s32.totalorder %s29, %s30
      %p41 = scmp.eq.s32.totalorder %s21, 0
      %p42 = por %p40, %p41
      %p43 = scmp.ne.s32.totalorder %s29, %s30
      %p44 = scmp.eq.s32.totalorder %s22, 3
      %p45 = por %p43, %p44
      %p47 = scmp.ne.s32.totalorder %s30, %s46
      %p48 = scmp.eq.s32.totalorder %s22, 0
      %p49 = por %p47, %p48
      %s51 = sadd.s32 %s50, 1
      %p54 = scmp.eq.s32.totalorder %s16, 3
      %p55 = scmp.ne.s32.totalorder %s50, %s52
      %p56 = scmp.eq.s32.totalorder %s16, 0
      %p57 = por %p55, %p56
      %p58 = scmp.ne.s32.totalorder %s50, %s52
      %p59 = scmp.eq.s32.totalorder %s21, 3
      %p60 = por %p58, %p59
      %p61 = scmp.ne.s32.totalorder %s52, %s53
      %p62 = scmp.eq.s32.totalorder %s21, 0
      %p63 = por %p61, %p62
      %p64 = scmp.ne.s32.totalorder %s52, %s53
      %p65 = scmp.eq.s32.totalorder %s22, 3
      %p66 = por %p64, %p65
      %p68 = scmp.ne.s32.totalorder %s53, %s67
      %p69 = scmp.eq.s32.totalorder %s22, 0
      %p70 = por %p68, %p69
      %s72 = sadd.s32 %s71, 1
      %p75 = scmp.eq.s32.totalorder %s16, 3
      %p76 = scmp.ne.s32.totalorder %s71, %s73
      %p77 = scmp.eq.s32.totalorder %s16, 0
      %p78 = por %p76, %p77
      %p79 = scmp.ne.s32.totalorder %s71, %s73
      %p80 = scmp.eq.s32.totalorder %s21, 3
      %p81 = por %p79, %p80
      %p82 = scmp.ne.s32.totalorder %s73, %s74
      %p83 = scmp.eq.s32.totalorder %s21, 0
      %p84 = por %p82, %p83
      %p85 = scmp.ne.s32.totalorder %s73, %s74
      %p86 = scmp.eq.s32.totalorder %s22, 3
      %p87 = por %p85, %p86
      %p89 = scmp.ne.s32.totalorder %s74, %s88
      %p90 = scmp.eq.s32.totalorder %s22, 0
      %p91 = por %p89, %p90
      %s92 = ssub.s32 %s16, %s23
      %p93 = scmp.eq.s32.totalorder %s92, 0
      %s95 = sadd.s32 %s94, 1
      %s96 = scalar_select %p93, %s94, %s95
      %p99 = pneg %p93
      %p100 = scmp.eq.s32.totalorder %s16, 3
      %p101 = por %p99, %p100
      %p102 = scmp.ne.s32.totalorder %s94, %s97
      %p103 = scmp.eq.s32.totalorder %s16, 0
      %p104 = por %p102, %p103
      %p105 = scmp.ne.s32.totalorder %s94, %s97
      %p106 = scmp.eq.s32.totalorder %s21, 3
      %p107 = por %p105, %p106
      %p108 = scmp.ne.s32.totalorder %s97, %s98
      %p109 = scmp.eq.s32.totalorder %s21, 0
      %p110 = por %p108, %p109
      %p111 = scmp.ne.s32.totalorder %s97, %s98
      %p112 = scmp.eq.s32.totalorder %s22, 3
      %p113 = por %p111, %p112
      %p115 = scmp.ne.s32.totalorder %s98, %s114
      %p116 = scmp.eq.s32.totalorder %s22, 0
      %p117 = por %p115, %p116
      %p118 = scmp.le.s32.totalorder 1, %s16
      %p119 = scmp.lt.s32.totalorder %s16, 5
      %p120 = pnand %p118, %p119
      %p121 = pneg %p120
      // Predicated region
      $region9: #{tpu_custom_call.1} parent=5 // pred_check
        _
      $region10: #{tpu_custom_call.1} parent=5 // pred_check_branch
        %123 = sbr.rel (%p120) target = $region12
      $region11: #{tpu_custom_call.1} parent=5 // pred_region
        %s124 = ssub.s32 %s16, 1
        // Predicated region
        $region13: #{tpu_custom_call.1} parent=11 // pred_check
          %p125 = pneg %p63
        $region14: #{tpu_custom_call.1} parent=11 // pred_check_branch
          %127 = sbr.rel (%p125) target = $region16
        $region15: #{tpu_custom_call.1} parent=11 // pred_region
          %s129 = ssub.s32 512, 512
          %130 = vsyncadd [#allocation6], %s129
          %s131 = sshll.u32 [#allocation5], 4
          %s132 = int_to_ptr.vmem [resolvable:$true] %s131
          %137 = dma.hbm_to_vmem [thread:$0]  %s1, 512, %s132, [#allocation6], 128, 128, 8
        $region16: #{tpu_custom_call.1} parent=11 // pred_fallthru
          _
        // Predicated region
        $region17: #{tpu_custom_call.1} parent=11 // pred_check
          %p138 = pneg %p84
        $region18: #{tpu_custom_call.1} parent=11 // pred_check_branch
          %140 = sbr.rel (%p138) target = $region20
        $region19: #{tpu_custom_call.1} parent=11 // pred_region
          _
        $region20: #{tpu_custom_call.1} parent=11 // pred_fallthru
          _
      $region12: #{tpu_custom_call.1} parent=5 // pred_fallthru
        _
      %p141 = scmp.lt.s32.totalorder %s16, 4
      // Predicated region
      $region21: #{tpu_custom_call.1} parent=5 // pred_check
        %p142 = pneg %p141
      $region22: #{tpu_custom_call.1} parent=5 // pred_check_branch
        %144 = sbr.rel (%p142) target = $region24
      $region23: #{tpu_custom_call.1} parent=5 // pred_region
        // Predicated region
        $region25: #{tpu_custom_call.1} parent=23 // pred_check
          %p145 = pneg %p36
        $region26: #{tpu_custom_call.1} parent=23 // pred_check_branch
          %147 = sbr.rel (%p145) target = $region28
        $region27: #{tpu_custom_call.1} parent=23 // pred_region
          %s148 = sand.u32 %s26, 1
          %s149 = scalar_lea.sflag [#allocation3], %s148
          %s150 = sand.u32 %s26, 1
          %s151 = smul.addr %s150, 8
          %s152 = scalar_lea.vmem [#allocation2], %s151
          %s154 = ssub.s32 128, 128
          %155 = vsyncadd %s149, %s154
          %s156 = smul.addr %s16, 128
          %s157 = scalar_lea.hbm %s0, %s156
          %s159 = sshll.u32 %s152, 4
          %s160 = int_to_ptr.vmem [resolvable:$true] %s159
          %162 = dma.hbm_to_vmem [thread:$0]  %s157, 128, %s160, %s149
        $region28: #{tpu_custom_call.1} parent=23 // pred_fallthru
          _
      $region24: #{tpu_custom_call.1} parent=5 // pred_fallthru
        _
      %p163 = scmp.le.s32.totalorder 1, %s16
      %p164 = scmp.lt.s32.totalorder %s16, 5
      %p165 = pnand %p163, %p164
      %p166 = pneg %p165
      // Predicated region
      $region29: #{tpu_custom_call.1} parent=5 // pred_check
        _
      $region30: #{tpu_custom_call.1} parent=5 // pred_check_branch
        %168 = sbr.rel (%p165) target = $region32
      $region31: #{tpu_custom_call.1} parent=5 // pred_region
        %s169 = ssub.s32 %s16, 1
        %s170 = sand.u32 %s29, 1
        %s171 = scalar_lea.sflag [#allocation3], %s170
        %s172 = sand.u32 %s29, 1
        %s173 = smul.addr %s172, 8
        %s174 = scalar_lea.vmem [#allocation2], %s173
        // Predicated region
        $region33: #{tpu_custom_call.1} parent=31 // pred_check
          %p175 = pneg %p42
        $region34: #{tpu_custom_call.1} parent=31 // pred_check_branch
          %177 = sbr.rel (%p175) target = $region36
        $region35: #{tpu_custom_call.1} parent=31 // pred_region
          %178 = dma.done %s171, 128
        $region36: #{tpu_custom_call.1} parent=31 // pred_fallthru
          _
        // Predicated region
        $region37: #{tpu_custom_call.1} parent=31 // pred_check
          %p179 = pneg %p63
        $region38: #{tpu_custom_call.1} parent=31 // pred_check_branch
          %181 = sbr.rel (%p179) target = $region40
        $region39: #{tpu_custom_call.1} parent=31 // pred_region
          %182 = dma.done [#allocation6], 512
        $region40: #{tpu_custom_call.1} parent=31 // pred_fallthru
          _
        %s183 = sand.u32 %s29, 1
        %s184 = scalar_lea.sflag [#allocation3], %s183
        %s185 = sand.u32 %s29, 1
        %s186 = smul.addr %s185, 8
        %s187 = scalar_lea.vmem [#allocation2], %s186
        %p188 = pneg %p42
        %p189 = pneg %p39
        %p190 = pneg %p63
        %p191 = pneg %p60
        %p192 = pneg %p84
        %p193 = pneg %p81
        %p194 = pneg %p110
        %p195 = pneg %p107
        %s196 = sand.u32 %s97, 1
        %s197 = scalar_lea.sflag [#allocation4], %s196
        %s198 = sand.u32 %s97, 1
        %s199 = smul.addr %s198, 8
        %s200 = scalar_lea.vmem [#allocation7], %s199
        %v201 = vld [vmem:[%s174] sm:$0xff]
        %v202 = vld [vmem:[#allocation5] sm:$0xff]
        %v203 = vld [vmem:[#allocation5 + $0x8] sm:$0xff]
        %v204 = vld [vmem:[#allocation5 + $0x10] sm:$0xff]
        %v205 = vld [vmem:[#allocation5 + $0x18] sm:$0xff]
        %v206 = vld [vmem:[%s2] sm:$0x1]
        %v208 = vlaneseq
        %v209 = vshrl.u32 %v208, 7
        %v210 = vsub.s32 0, %v209
        %v211 = vrot.slane %v206, %v210
        %vm213 = vcmask 261120
        %v215 = vsel %vm213, %v201, 0
        %217 = vmatprep.subr.mxu0 0.0
        %218 = vmatpush1.msra.mxu0 0.0
        %219 = vmatprep.subr.mxu0 0.0
        %220 = vmatpush1.msra.mxu0 0.0
        %221 = vmatprep.subr.mxu0 0.0
        %222 = vmatpush1.msra.mxu0 0.0
        %223 = vmatprep.subr.mxu0 0.0
        %224 = vmatpush1.msra.mxu0 0.0
        %225 = vmatprep.subr.mxu0 0.0
        %226 = vmatpush1.msra.mxu0 0.0
        %227 = vmatprep.subr.mxu0 0.0
        %228 = vmatpush1.msra.mxu0 0.0
        %229 = vmatprep.subr.mxu0 0.0
        %230 = vmatpush1.msra.mxu0 0.0
        %231 = vmatprep.subr.mxu0 0.0
        %232 = vmatpush1.msra.mxu0 0.0
        %233 = vmatprep.subr.mxu0 0.0
        %234 = vmatpush1.msra.mxu0 0.0
        %235 = vmatprep.subr.mxu0 0.0
        %236 = vmatpush1.msra.mxu0 0.0
        %237 = vmatprep.subr.mxu0 0.0
        %238 = vmatpush1.msra.mxu0 0.0
        %239 = vmatprep.subr.mxu0 0.0
        %240 = vmatpush1.msra.mxu0 0.0
        %241 = vmatprep.subr.mxu0 0.0
        %242 = vmatpush1.msra.mxu0 %v205
        %243 = vmatprep.subr.mxu0 0.0
        %244 = vmatpush1.msra.mxu0 %v204
        %245 = vmatprep.subr.mxu0 0.0
        %246 = vmatpush1.msra.mxu0 %v203
        %247 = vmatprep.subr.mxu0 0.0
        %248 = vmatpush1.msra.mxu0 %v202
        %249 = vmatprep.subr.mxu0 0.0
        %250 = vmatpush2.msra.mxu0 0.0
        %251 = vmatprep.subr.mxu0 0.0
        %252 = vmatpush2.msra.mxu0 0.0
        %253 = vmatprep.subr.mxu0 0.0
        %254 = vmatpush2.msra.mxu0 0.0
        %255 = vmatprep.subr.mxu0 0.0
        %256 = vmatpush2.msra.mxu0 0.0
        %257 = vmatprep.subr.mxu0 0.0
        %258 = vmatpush2.msra.mxu0 0.0
        %259 = vmatprep.subr.mxu0 0.0
        %260 = vmatpush2.msra.mxu0 0.0
        %261 = vmatprep.subr.mxu0 0.0
        %262 = vmatpush2.msra.mxu0 0.0
        %263 = vmatprep.subr.mxu0 0.0
        %264 = vmatpush2.msra.mxu0 0.0
        %265 = vmatprep.subr.mxu0 0.0
        %266 = vmatpush2.msra.mxu0 0.0
        %267 = vmatprep.subr.mxu0 0.0
        %268 = vmatpush2.msra.mxu0 0.0
        %269 = vmatprep.subr.mxu0 0.0
        %270 = vmatpush2.msra.mxu0 0.0
        %271 = vmatprep.subr.mxu0 0.0
        %272 = vmatpush2.msra.mxu0 0.0
        %273 = vmatprep.subr.mxu0 0.0
        %274 = vmatpush2.msra.mxu0 0.0
        %275 = vmatprep.subr.mxu0 0.0
        %276 = vmatpush2.msra.mxu0 0.0
        %277 = vmatprep.subr.mxu0 0.0
        %278 = vmatpush2.msra.mxu0 0.0
        %279 = vmatprep.subr.mxu0 0.0
        %280 = vmatpush2.msra.mxu0 0.0
        %281 = vmatprep.mubr.f32.mxu0 0.0
        %282 = vmatmul.mubr.f32.gmra.mxu0 %v215
        %v283 = vpop.f32.mrf.mxu0
        %v284 = vadd.f32 %v211, %v283
        %v285 = vpop.f32.mrf.mxu0
        %286 = vdwg.mxu0
        %vm287 = vcmask 785408
        %288 = vst.msk [vmem:[%s200] sm:$0xff] %vm287, %v284
        %s289 = sand.u32 %s97, 1
        %s290 = scalar_lea.sflag [#allocation4], %s289
        %s291 = sand.u32 %s97, 1
        %s292 = smul.addr %s291, 8
        %s293 = scalar_lea.vmem [#allocation7], %s292
        // Predicated region
        $region41: #{tpu_custom_call.1} parent=31 // pred_check
          %p294 = pneg %p107
        $region42: #{tpu_custom_call.1} parent=31 // pred_check_branch
          %296 = sbr.rel (%p294) target = $region44
        $region43: #{tpu_custom_call.1} parent=31 // pred_region
          %s298 = ssub.s32 128, 128
          %299 = vsyncadd %s290, %s298
          %s300 = smul.addr %s21, 128
          %s301 = scalar_lea.hbm %s3, %s300
          %s303 = sshll.u32 %s293, 4
          %s304 = int_to_ptr.vmem [resolvable:$true] %s303
          %306 = dma.vmem_to_hbm [thread:$0]  %s304, 128, %s301, %s290
        $region44: #{tpu_custom_call.1} parent=31 // pred_fallthru
          _
      $region32: #{tpu_custom_call.1} parent=5 // pred_fallthru
        _
      %p307 = scmp.le.s32.totalorder 2, %s16
      // Predicated region
      $region45: #{tpu_custom_call.1} parent=5 // pred_check
        %p308 = pneg %p307
      $region46: #{tpu_custom_call.1} parent=5 // pred_check_branch
        %310 = sbr.rel (%p308) target = $region48
      $region47: #{tpu_custom_call.1} parent=5 // pred_region
        %s311 = ssub.s32 %s16, 2
        // Predicated region
        $region49: #{tpu_custom_call.1} parent=47 // pred_check
          %p312 = pneg %p113
        $region50: #{tpu_custom_call.1} parent=47 // pred_check_branch
          %314 = sbr.rel (%p312) target = $region52
        $region51: #{tpu_custom_call.1} parent=47 // pred_region
          %s315 = sand.u32 %s98, 1
          %s316 = scalar_lea.sflag [#allocation4], %s315
          %s317 = sand.u32 %s98, 1
          %s318 = smul.addr %s317, 8
          %s319 = scalar_lea.vmem [#allocation7], %s318
          %320 = dma.done %s316, 128
        $region52: #{tpu_custom_call.1} parent=47 // pred_fallthru
          _
      $region48: #{tpu_custom_call.1} parent=5 // pred_fallthru
        _
    $region6: #{tpu_custom_call.1} parent=1 // loop_footer
      %s20 = sadd.s32 1, %s16
    $region7: #{tpu_custom_call.1} parent=1 // loop_footer_branch
      %15 = sbr.rel target = $region3
    $region8: #{tpu_custom_call.1} parent=1 // loop_exit
      _
    %321 = vsyncpa [#allocation3], 1
    %s322 = scalar_lea.sflag [#allocation3], 1
    %323 = vsyncpa %s322, 1
    %324 = vsyncpa [#allocation6], 1
    %325 = vsyncpa [#allocation4], 1
    %s326 = scalar_lea.sflag [#allocation4], 1
    %327 = vsyncpa %s326, 1

</llo_original>
